<compile_context>
chip_gen: v5e
topology: v5e:2x2
jax: 0.10.0
libtpu: 0.0.40
codegen_flags: <defaults>
</compile_context>

<pallas_src>
import numpy as np
import jax
import jax.numpy as jnp
from jax.experimental import pallas as pl
from jax.experimental.pallas import tpu as pltpu


GROUP = 128  # per-model lane-group width in the fused final-layer output


def _round_up(n, k):
    return (n + k - 1) // k * k


def _quirky_sum_weights(num_models):
    """Static weights implied by: out = o[0]; for idx in (1, M-1): out += o[idx]."""
    assert num_models >= 2, "original module index-errors for num_models < 2"
    w = {0: 1}
    for idx in (1, num_models - 1):
        w[idx] = w.get(idx, 0) + 1
    return w


# --------------------------------------------------------------------------- #
# One-time host-side parameter packing (NOT in the per-call hot path).
# --------------------------------------------------------------------------- #
def pack_params(params):
    """Fuses the per-model parameters into two slabs.

    Returns (wslab, aux, static):
      wslab: [rows, W] f32 -- three full-width row blocks:
               rows [oA, oA+F)  : encoder weights (models concatenated along lanes)
               rows [oB, oB+K2) : fused [FFN-1 | coeff-1] block-diagonal weights
               rows [oC, oC+K3) : fused [FFN-2 | coeff-2], per-model lane groups
      aux:   [8, W] f32 -- row 0: enc bias, row 1: fused layer-1 bias,
               row 2: fused layer-2 bias (+ constant-1 lane per model),
               row 3: mult*cW3 (+ mult*cb3 on the constant-1 lane); rows 4..7 zero
      static: python ints needed to build the kernel.
    """
    encW = np.asarray(params["encW"], np.float32)
    encb = np.asarray(params["encb"], np.float32)
    ffnW1 = np.asarray(params["ffnW1"], np.float32)
    ffnb1 = np.asarray(params["ffnb1"], np.float32)
    ffnW2 = np.asarray(params["ffnW2"], np.float32)
    ffnb2 = np.asarray(params["ffnb2"], np.float32)
    cW1 = np.asarray(params["cW1"], np.float32)
    cb1 = np.asarray(params["cb1"], np.float32)
    cW2 = np.asarray(params["cW2"], np.float32)
    cb2 = np.asarray(params["cb2"], np.float32)
    cW3 = np.asarray(params["cW3"], np.float32)
    cb3 = np.asarray(params["cb3"], np.float32)

    M, F, H = encW.shape
    T = ffnW2.shape[2]
    H3 = H // 3
    H9 = H3 // 3

    wdict = _quirky_sum_weights(M)
    idxs = sorted(wdict)                      # contributing models: {0, 1, M-1}
    Mc = len(idxs)

    HW, H3W = Mc * H, Mc * H3
    assert T + 1 + H9 <= GROUP, "per-model [temp | 1 | c2] segment must fit 128 lanes"
    W = max(_round_up(HW + H3W, 128), Mc * GROUP)   # common lane width of the slabs
    K2 = _round_up(HW, 128)                          # K of fused layer-1 matmul
    K3 = _round_up(HW + H3W, 128)                    # K of fused layer-2 matmul
    oA = 0
    oB = _round_up(F, 8)
    oC = oB + K2
    rows = oC + K3

    wslab = np.zeros((rows, W), np.float32)
    aux = np.zeros((8, W), np.float32)

    for j, i in enumerate(idxs):
        mult = float(wdict[i])                # quirky-sum multiplicity (0/1/2 exact)
        g = j * GROUP
        # --- encoder (simplified MPN): x @ encW_i -> emb lanes [j*H, (j+1)*H) ---
        wslab[oA:oA + F, j * H:(j + 1) * H] = encW[i]
        aux[0, j * H:(j + 1) * H] = encb[i, 0]
        # --- fused layer 1: emb -> [h | c1]  (FFN Linear-1 and coeff Linear-1) ---
        wslab[oB + j * H:oB + (j + 1) * H, j * H:(j + 1) * H] = ffnW1[i]
        aux[1, j * H:(j + 1) * H] = ffnb1[i, 0]
        wslab[oB + j * H:oB + (j + 1) * H, HW + j * H3:HW + (j + 1) * H3] = cW1[i]
        aux[1, HW + j * H3:HW + (j + 1) * H3] = cb1[i, 0]
        # --- fused layer 2: [h | c1] -> per-model lane group [temp | 1 | c2] ---
        wslab[oC + j * H:oC + (j + 1) * H, g:g + T] = ffnW2[i]
        aux[2, g:g + T] = ffnb2[i, 0]
        aux[2, g + T] = 1.0                    # constant-1 lane (carries cb3 later)
        wslab[oC + HW + j * H3:oC + HW + (j + 1) * H3,
              g + T + 1:g + T + 1 + H9] = cW2[i]
        aux[2, g + T + 1:g + T + 1 + H9] = cb2[i, 0]
        # --- coeff Linear-3 (+ multiplicity), kept on the VPU/XLU path ---
        aux[3, g + T] = mult * cb3[i, 0, 0]
        aux[3, g + T + 1:g + T + 1 + H9] = mult * cW3[i][:, 0]

    static = dict(F=F, T=T, Mc=Mc, W=W, K2=K2, K3=K3, oA=oA, oB=oB, oC=oC)
    return jnp.asarray(wslab), jnp.asarray(aux), static


# --------------------------------------------------------------------------- #
# Kernel
# --------------------------------------------------------------------------- #
def _make_kernel(st):
    F, T, Mc = st["F"], st["T"], st["Mc"]
    W, K2, K3 = st["W"], st["K2"], st["K3"]
    oA, oB, oC = st["oA"], st["oB"], st["oC"]

    def kernel(x_ref, w_ref, aux_ref, out_ref):
        f32 = jnp.float32
        x = x_ref[...]
        # Static, 8-row-aligned, full-width views of the single weight slab.
        wA = w_ref[oA:oA + F, :]
        wB = w_ref[oB:oB + K2, :]
        wC = w_ref[oC:oC + K3, :]
        encb = aux_ref[0:1, :]
        b1 = aux_ref[1:2, :]
        b2 = aux_ref[2:3, :]
        cw3 = aux_ref[3:4, :]

        # 3 dependent MXU ops total (was 5): encoder, fused [FFN1|coef1],
        # fused [FFN2|coef2].  Off-block zero columns/rows are free on the
        # (otherwise idle) MXU and contribute exact +0.0 (finite inputs assumed).
        emb = jnp.maximum(jnp.dot(x, wA, preferred_element_type=f32) + encb, 0.0)
        s2 = jnp.maximum(
            jnp.dot(emb[:, :K2], wB, preferred_element_type=f32) + b1, 0.0)
        s3 = jnp.dot(s2[:, :K3], wC, preferred_element_type=f32) + b2

        # Selective ReLU: only coeff-head lanes (local lane >= T+1) are
        # activated; temp lanes [0, T) and the constant-1 lane T pass through.
        local = jax.lax.broadcasted_iota(jnp.int32, (1, W), 1) % GROUP
        s3 = jnp.where(local >= T + 1, jnp.maximum(s3, 0.0), s3)

        # Final 1-wide coefficient linear + quirky-sum combine on the VPU/XLU:
        # coef_m = sum(c2_m * mult*cW3_m) + mult*cb3_m  (cb3 via constant-1 lane).
        p = s3 * cw3
        acc = None
        for m in range(Mc):                  # static unroll, vreg-aligned slices
            lo, hi = m * GROUP, (m + 1) * GROUP
            coef = jnp.sum(p[:, lo:hi], axis=-1, keepdims=True)   # [B, 1]
            term = s3[:, lo:hi] * coef       # temp_m * coef_m lives in lanes [0, T)
            acc = term if acc is None else acc + term
        out_ref[...] = acc                   # single lane-dense [B, 128] store

    return kernel


def make_forward(static):
    """Builds the jitted forward; consumes only pre-packed arrays."""
    kernel = _make_kernel(static)
    T = static["T"]

    @jax.jit
    def forward(x, wslab, aux):
        B = x.shape[0]
        vmem = pl.BlockSpec(memory_space=pltpu.MemorySpace.VMEM)
        out = pl.pallas_call(
            kernel,
            out_shape=jax.ShapeDtypeStruct((B, GROUP), jnp.float32),
            in_specs=[vmem, vmem, vmem],
            out_specs=vmem,
        )(x, wslab, aux)
        return out[:, :T]

    return forward


# --------------------------------------------------------------------------- #
# Plain-JAX reference (literal per-model structure + quirky summation)
# --------------------------------------------------------------------------- #
def _reference(x, params):
    M = params["encW"].shape[0]
    outs = []
    for m in range(M):
        emb = jax.nn.relu(x @ params["encW"][m] + params["encb"][m][0])
        h = jax.nn.relu(emb @ params["ffnW1"][m] + params["ffnb1"][m][0])
        temp = h @ params["ffnW2"][m] + params["ffnb2"][m][0]
        c = jax.nn.relu(emb @ params["cW1"][m] + params["cb1"][m][0])
        c = jax.nn.relu(c @ params["cW2"][m] + params["cb2"][m][0])
        coef = c @ params["cW3"][m] + params["cb3"][m][0]
        outs.append(temp * coef)
    out = outs[0]
    for idx in (1, M - 1):
        out = out + outs[idx]
    return out


def _init_params(key, num_models, F, H, T):
    H3, H9 = H // 3, H // 3 // 3
    shapes = {
        "encW": (num_models, F, H),   "encb": (num_models, 1, H),
        "ffnW1": (num_models, H, H),  "ffnb1": (num_models, 1, H),
        "ffnW2": (num_models, H, T),  "ffnb2": (num_models, 1, T),
        "cW1": (num_models, H, H3),   "cb1": (num_models, 1, H3),
        "cW2": (num_models, H3, H9),  "cb2": (num_models, 1, H9),
        "cW3": (num_models, H9, 1),   "cb3": (num_models, 1, 1),
    }
    params = {}
    keys = jax.random.split(key, len(shapes))
    for k, (name, shp) in zip(keys, shapes.items()):
        fan_in = shp[1]
        params[name] = jax.random.normal(k, shp, jnp.float32) / jnp.sqrt(fan_in)
    return params


if __name__ == "__main__":
    # Ensemble of num_models MoleculeModels; batch of molecules; feature dim F;
    # hidden_size H; num_tasks T (regression / mse configuration).
    B, F, H, T = 8, 64, 48, 4
    num_models = 3

    key = jax.random.PRNGKey(0)
    kx, kp = jax.random.split(key)
    x = jax.random.normal(kx, (B, F), jnp.float32)
    params = _init_params(kp, num_models, F, H, T)

    # One-time parameter packing (outside the hot jit), then kernel-only forward.
    wslab, aux, static = pack_params(params)
    forward = make_forward(static)

    out = jax.block_until_ready(forward(x, wslab, aux))

    ref = _reference(x, params)
    if not jnp.allclose(out, ref, atol=1e-3, rtol=1e-3):
        raise AssertionError("Pallas output does not match JAX reference")

    print("KERNEL_OK")
</pallas_src>

<mosaic_0001>
module attributes {stable_mosaic.version = 11 : i64} {
  func.func @kernel(%arg0: memref<8x64xf32, #tpu.memory_space<vmem>>, %arg1: memref<576x384xf32, #tpu.memory_space<vmem>>, %arg2: memref<8x384xf32, #tpu.memory_space<vmem>>, %arg3: memref<8x128xf32, #tpu.memory_space<vmem>>) attributes {dimension_semantics = [], scalar_prefetch = 0 : i64, scratch_operands = 0 : i64, tpu.core_type = #tpu.core_type<tc>} {
    %c0 = arith.constant 0 : index
    %c0_0 = arith.constant 0 : index
    %0 = vector.load %arg0[%c0, %c0_0] : memref<8x64xf32, #tpu.memory_space<vmem>>, vector<8x64xf32>
    %c0_1 = arith.constant 0 : index
    %c0_2 = arith.constant 0 : index
    %1 = vector.load %arg1[%c0_1, %c0_2] : memref<576x384xf32, #tpu.memory_space<vmem>>, vector<64x384xf32>
    %c64 = arith.constant 64 : index
    %c0_3 = arith.constant 0 : index
    %2 = vector.load %arg1[%c64, %c0_3] : memref<576x384xf32, #tpu.memory_space<vmem>>, vector<256x384xf32>
    %c320 = arith.constant 320 : index
    %c0_4 = arith.constant 0 : index
    %3 = vector.load %arg1[%c320, %c0_4] : memref<576x384xf32, #tpu.memory_space<vmem>>, vector<256x384xf32>
    %c0_5 = arith.constant 0 : index
    %c0_6 = arith.constant 0 : index
    %4 = vector.load %arg2[%c0_5, %c0_6] : memref<8x384xf32, #tpu.memory_space<vmem>>, vector<1x384xf32>
    %c1 = arith.constant 1 : index
    %c0_7 = arith.constant 0 : index
    %5 = vector.load %arg2[%c1, %c0_7] : memref<8x384xf32, #tpu.memory_space<vmem>>, vector<1x384xf32>
    %c2 = arith.constant 2 : index
    %c0_8 = arith.constant 0 : index
    %6 = vector.load %arg2[%c2, %c0_8] : memref<8x384xf32, #tpu.memory_space<vmem>>, vector<1x384xf32>
    %c3 = arith.constant 3 : index
    %c0_9 = arith.constant 0 : index
    %7 = vector.load %arg2[%c3, %c0_9] : memref<8x384xf32, #tpu.memory_space<vmem>>, vector<1x384xf32>
    %cst = arith.constant dense<0.000000e+00> : vector<8x384xf32>
    %8 = tpu.matmul %0, %1, %cst {dimension_numbers = #tpu.dot_dimension_numbers<[1], [0], [0], [1], [0, 0, 1, 1], [], []>} : vector<8x64xf32>, vector<64x384xf32>, vector<8x384xf32> -> vector<8x384xf32>
    %9 = vector.broadcast %4 : vector<1x384xf32> to vector<8x384xf32>
    %10 = arith.addf %8, %9 : vector<8x384xf32>
    %cst_10 = arith.constant 0.000000e+00 : f32
    %11 = vector.broadcast %cst_10 : f32 to vector<8x384xf32>
    %12 = arith.maximumf %10, %11 : vector<8x384xf32>
    %13 = vector.extract_strided_slice %12 {offsets = [0, 0], sizes = [8, 256], strides = [1, 1]} : vector<8x384xf32> to vector<8x256xf32>
    %cst_11 = arith.constant dense<0.000000e+00> : vector<8x384xf32>
    %14 = tpu.matmul %13, %2, %cst_11 {dimension_numbers = #tpu.dot_dimension_numbers<[1], [0], [0], [1], [0, 0, 1, 1], [], []>} : vector<8x256xf32>, vector<256x384xf32>, vector<8x384xf32> -> vector<8x384xf32>
    %15 = vector.broadcast %5 : vector<1x384xf32> to vector<8x384xf32>
    %16 = arith.addf %14, %15 : vector<8x384xf32>
    %cst_12 = arith.constant 0.000000e+00 : f32
    %17 = vector.broadcast %cst_12 : f32 to vector<8x384xf32>
    %18 = arith.maximumf %16, %17 : vector<8x384xf32>
    %19 = vector.extract_strided_slice %18 {offsets = [0, 0], sizes = [8, 256], strides = [1, 1]} : vector<8x384xf32> to vector<8x256xf32>
    %cst_13 = arith.constant dense<0.000000e+00> : vector<8x384xf32>
    %20 = tpu.matmul %19, %3, %cst_13 {dimension_numbers = #tpu.dot_dimension_numbers<[1], [0], [0], [1], [0, 0, 1, 1], [], []>} : vector<8x256xf32>, vector<256x384xf32>, vector<8x384xf32> -> vector<8x384xf32>
    %21 = vector.broadcast %6 : vector<1x384xf32> to vector<8x384xf32>
    %22 = arith.addf %20, %21 : vector<8x384xf32>
    %23 = tpu.iota {dimensions = array<i32: 1>} : vector<1x384xi32>
    %c128_i32 = arith.constant 128 : i32
    %c0_i32 = arith.constant 0 : i32
    %24 = arith.cmpi eq, %c128_i32, %c0_i32 : i32
    %c1_i32 = arith.constant 1 : i32
    %25 = arith.select %24, %c1_i32, %c128_i32 : i32
    %26 = vector.broadcast %25 : i32 to vector<1x384xi32>
    %27 = arith.remsi %23, %26 : vector<1x384xi32>
    %c0_i32_14 = arith.constant 0 : i32
    %28 = vector.broadcast %c0_i32_14 : i32 to vector<1x384xi32>
    %29 = arith.cmpi ne, %27, %28 : vector<1x384xi32>
    %c0_i32_15 = arith.constant 0 : i32
    %30 = vector.broadcast %c0_i32_15 : i32 to vector<1x384xi32>
    %31 = arith.cmpi slt, %27, %30 : vector<1x384xi32>
    %c0_i32_16 = arith.constant 0 : i32
    %32 = arith.cmpi slt, %25, %c0_i32_16 : i32
    %33 = vector.broadcast %32 : i1 to vector<1x384xi1>
    %34 = vector.broadcast %33 : vector<1x384xi1> to vector<1x384xi1>
    %35 = arith.xori %31, %34 : vector<1x384xi1>
    %36 = arith.andi %35, %29 : vector<1x384xi1>
    %37 = vector.broadcast %25 : i32 to vector<1x384xi32>
    %38 = arith.addi %27, %37 : vector<1x384xi32>
    %39 = arith.select %36, %38, %27 : vector<1x384xi1>, vector<1x384xi32>
    %c5_i32 = arith.constant 5 : i32
    %40 = vector.broadcast %c5_i32 : i32 to vector<1x384xi32>
    %41 = arith.cmpi sge, %39, %40 : vector<1x384xi32>
    %cst_17 = arith.constant 0.000000e+00 : f32
    %42 = vector.broadcast %cst_17 : f32 to vector<8x384xf32>
    %43 = arith.maximumf %22, %42 : vector<8x384xf32>
    %44 = vector.shape_cast %41 : vector<1x384xi1> to vector<1x384xi1>
    %45 = vector.broadcast %44 : vector<1x384xi1> to vector<8x384xi1>
    %46 = arith.select %45, %43, %22 : vector<8x384xi1>, vector<8x384xf32>
    %47 = vector.broadcast %7 : vector<1x384xf32> to vector<8x384xf32>
    %48 = arith.mulf %46, %47 : vector<8x384xf32>
    %49 = vector.extract_strided_slice %48 {offsets = [0, 0], sizes = [8, 128], strides = [1, 1]} : vector<8x384xf32> to vector<8x128xf32>
    %cst_18 = arith.constant dense<0.000000e+00> : vector<8xf32>
    %50 = vector.multi_reduction <add>, %49, %cst_18 [1] : vector<8x128xf32> to vector<8xf32>
    %51 = vector.shape_cast %50 : vector<8xf32> to vector<8x1xf32>
    %52 = vector.extract_strided_slice %46 {offsets = [0, 0], sizes = [8, 128], strides = [1, 1]} : vector<8x384xf32> to vector<8x128xf32>
    %53 = vector.broadcast %51 : vector<8x1xf32> to vector<8x128xf32>
    %54 = arith.mulf %52, %53 : vector<8x128xf32>
    %55 = vector.extract_strided_slice %48 {offsets = [0, 128], sizes = [8, 128], strides = [1, 1]} : vector<8x384xf32> to vector<8x128xf32>
    %cst_19 = arith.constant dense<0.000000e+00> : vector<8xf32>
    %56 = vector.multi_reduction <add>, %55, %cst_19 [1] : vector<8x128xf32> to vector<8xf32>
    %57 = vector.shape_cast %56 : vector<8xf32> to vector<8x1xf32>
    %58 = vector.extract_strided_slice %46 {offsets = [0, 128], sizes = [8, 128], strides = [1, 1]} : vector<8x384xf32> to vector<8x128xf32>
    %59 = vector.broadcast %57 : vector<8x1xf32> to vector<8x128xf32>
    %60 = arith.mulf %58, %59 : vector<8x128xf32>
    %61 = arith.addf %54, %60 : vector<8x128xf32>
    %62 = vector.extract_strided_slice %48 {offsets = [0, 256], sizes = [8, 128], strides = [1, 1]} : vector<8x384xf32> to vector<8x128xf32>
    %cst_20 = arith.constant dense<0.000000e+00> : vector<8xf32>
    %63 = vector.multi_reduction <add>, %62, %cst_20 [1] : vector<8x128xf32> to vector<8xf32>
    %64 = vector.shape_cast %63 : vector<8xf32> to vector<8x1xf32>
    %65 = vector.extract_strided_slice %46 {offsets = [0, 256], sizes = [8, 128], strides = [1, 1]} : vector<8x384xf32> to vector<8x128xf32>
    %66 = vector.broadcast %64 : vector<8x1xf32> to vector<8x128xf32>
    %67 = arith.mulf %65, %66 : vector<8x128xf32>
    %68 = arith.addf %61, %67 : vector<8x128xf32>
    %c0_21 = arith.constant 0 : index
    %c0_22 = arith.constant 0 : index
    %69 = vector.load %arg3[%c0_21, %c0_22] : memref<8x128xf32, #tpu.memory_space<vmem>>, vector<8x128xf32>
    tpu.vector_store %arg3[%c0_21, %c0_22], %68 {strides = array<i32>} : memref<8x128xf32, #tpu.memory_space<vmem>>, vector<8x128xf32>,
    return
  }
}

</mosaic_0001>

<llo_original>
// kernel: forward.1
$region0: #{forward.1}
  #allocation0 [shape = 'u32[]', space=smem, size = 0x4, offset = 0x4, fixed_abs, tag = 'smem constant byte address 0x4 - core index']
  #allocation1 [shape = 'u32[72,128]{1,0:T(1,128)}', space=vmem, size = 0x9000, scoped, tag = 'internal scratch']
  %s0 = inlined_call_operand.hbm [shape: f32[8,64], index: 0, kind: input, shape index: {}]
  %s1 = inlined_call_operand.hbm [shape: f32[576,384], index: 1, kind: input, shape index: {}]
  %s2 = inlined_call_operand.hbm [shape: f32[8,384], index: 2, kind: input, shape index: {}]
  %s3 = inlined_call_operand.vmem [shape: f32[8,128], index: 3, kind: output, shape index: {}]
  %s4 = sld [smem:[#allocation0]]
  $region34: #{forward.1} parent=0
    _
  %s6 = ssub.s32 1, %s4
  %s7 = scalar_select 0, %s6, %s4
  $region1: #{forward.1} parent=0
    #allocation2 [shape = 'u8[4096]{0}', space=vmem, size = 0x1000, scoped, tag = 'input window, operand 0, single buffered']
    #allocation3 [shape = 's32[1]{0}', space=sflag, size = 0x4, scoped, tag = 'scoped memory for forward.1']
    #allocation4 [shape = 'u8[884736]{0}', space=vmem, size = 0xd8000, scoped, tag = 'input window, operand 1, single buffered']
    #allocation5 [shape = 's32[1]{0}', space=sflag, size = 0x4, scoped, tag = 'scoped memory for forward.1']
    #allocation6 [shape = 'u8[12288]{0}', space=vmem, size = 0x3000, scoped, tag = 'input window, operand 2, single buffered']
    %8 = vsyncpa [#allocation3], 0
    %9 = vsyncpa [#allocation5], 0
    // Predicated region
    $region2: #{forward.1} parent=1 // pred_check
      _
    $region3: #{forward.1} parent=1 // pred_check_branch
      %11 = sbr.rel (0) target = $region5
    $region4: #{forward.1} parent=1 // pred_region
      %13 = vsyncadd [#allocation3], 0
      %s15 = sshll.u32 %s0, 4
      %s16 = int_to_ptr.hbm [resolvable:$true] %s15
      %s17 = sshll.u32 [#allocation2], 4
      %s18 = int_to_ptr.vmem [resolvable:$true] %s17
      %20 = dma.hbm_to_vmem [thread:$0]  %s16, 128, %s18, [#allocation3]
    $region5: #{forward.1} parent=1 // pred_fallthru
      _
    // Predicated region
    $region6: #{forward.1} parent=1 // pred_check
      _
    $region7: #{forward.1} parent=1 // pred_check_branch
      %22 = sbr.rel (0) target = $region9
    $region8: #{forward.1} parent=1 // pred_region
      %24 = vsyncadd [#allocation5], 0
      %s25 = sshll.u32 %s1, 4
      %s26 = int_to_ptr.hbm [resolvable:$true] %s25
      %s27 = sshll.u32 [#allocation4], 4
      %s28 = int_to_ptr.vmem [resolvable:$true] %s27
      %33 = dma.hbm_to_vmem [thread:$0]  %s26, 27648, %s28, [#allocation5], 384, 384, 24
    $region9: #{forward.1} parent=1 // pred_fallthru
      _
    // Predicated region
    $region10: #{forward.1} parent=1 // pred_check
      _
    $region11: #{forward.1} parent=1 // pred_check_branch
      %35 = sbr.rel (0) target = $region13
    $region12: #{forward.1} parent=1 // pred_region
      %37 = vsyncadd [#allocation5], 0
      %s39 = sshll.u32 %s2, 4
      %s40 = int_to_ptr.hbm [resolvable:$true] %s39
      %s41 = sshll.u32 [#allocation6], 4
      %s42 = int_to_ptr.vmem [resolvable:$true] %s41
      %44 = dma.hbm_to_vmem [thread:$0]  %s40, 384, %s42, [#allocation5]
    $region13: #{forward.1} parent=1 // pred_fallthru
      _
    // Predicated region
    $region14: #{forward.1} parent=1 // pred_check
      _
    $region15: #{forward.1} parent=1 // pred_check_branch
      %46 = sbr.rel (0) target = $region17
    $region16: #{forward.1} parent=1 // pred_region
      %48 = dma.done [#allocation3], 128
    $region17: #{forward.1} parent=1 // pred_fallthru
      _
    // Predicated region
    $region18: #{forward.1} parent=1 // pred_check
      _
    $region19: #{forward.1} parent=1 // pred_check_branch
      %50 = sbr.rel (0) target = $region21
    $region20: #{forward.1} parent=1 // pred_region
      %52 = dma.done [#allocation5], 27648
    $region21: #{forward.1} parent=1 // pred_fallthru
      _
    // Predicated region
    $region22: #{forward.1} parent=1 // pred_check
      _
    $region23: #{forward.1} parent=1 // pred_check_branch
      %54 = sbr.rel (0) target = $region25
    $region24: #{forward.1} parent=1 // pred_region
      %56 = dma.done [#allocation5], 384
    $region25: #{forward.1} parent=1 // pred_fallthru
      _
    %v57 = vld [vmem:[#allocation2] sm:$0xff]
    %v58 = vld [vmem:[#allocation4] sm:$0xff]
    %v59 = vld [vmem:[#allocation4 + $0x8] sm:$0xff]
    %v60 = vld [vmem:[#allocation4 + $0x18] sm:$0xff]
    %v61 = vld [vmem:[#allocation4 + $0x20] sm:$0xff]
    %v62 = vld [vmem:[#allocation4 + $0x30] sm:$0xff]
    %v63 = vld [vmem:[#allocation4 + $0x38] sm:$0xff]
    %v64 = vld [vmem:[#allocation4 + $0x48] sm:$0xff]
    %v65 = vld [vmem:[#allocation4 + $0x50] sm:$0xff]
    %v66 = vld [vmem:[#allocation4 + $0x60] sm:$0xff]
    %v67 = vld [vmem:[#allocation4 + $0x68] sm:$0xff]
    %v68 = vld [vmem:[#allocation4 + $0x78] sm:$0xff]
    %v69 = vld [vmem:[#allocation4 + $0x80] sm:$0xff]
    %v70 = vld [vmem:[#allocation4 + $0x90] sm:$0xff]
    %v71 = vld [vmem:[#allocation4 + $0x98] sm:$0xff]
    %v72 = vld [vmem:[#allocation4 + $0xa8] sm:$0xff]
    %v73 = vld [vmem:[#allocation4 + $0xb0] sm:$0xff]
    %v74 = vld [vmem:[#allocation4 + $0xc0] sm:$0xff]
    %v75 = vld [vmem:[#allocation4 + $0xc8] sm:$0xff]
    %v76 = vld [vmem:[#allocation4 + $0xd8] sm:$0xff]
    %v77 = vld [vmem:[#allocation4 + $0xe0] sm:$0xff]
    %v78 = vld [vmem:[#allocation4 + $0xf0] sm:$0xff]
    %v79 = vld [vmem:[#allocation4 + $0xf8] sm:$0xff]
    %v80 = vld [vmem:[#allocation4 + $0x108] sm:$0xff]
    %v81 = vld [vmem:[#allocation4 + $0x110] sm:$0xff]
    %v82 = vld [vmem:[#allocation4 + $0x120] sm:$0xff]
    %v83 = vld [vmem:[#allocation4 + $0x128] sm:$0xff]
    %v84 = vld [vmem:[#allocation4 + $0x138] sm:$0xff]
    %v85 = vld [vmem:[#allocation4 + $0x140] sm:$0xff]
    %v86 = vld [vmem:[#allocation4 + $0x150] sm:$0xff]
    %v87 = vld [vmem:[#allocation4 + $0x158] sm:$0xff]
    %v88 = vld [vmem:[#allocation4 + $0x168] sm:$0xff]
    %v89 = vld [vmem:[#allocation4 + $0x170] sm:$0xff]
    %v90 = vld [vmem:[#allocation4 + $0x180] sm:$0xff]
    %v91 = vld [vmem:[#allocation4 + $0x188] sm:$0xff]
    %v92 = vld [vmem:[#allocation4 + $0x198] sm:$0xff]
    %v93 = vld [vmem:[#allocation4 + $0x1a0] sm:$0xff]
    %v94 = vld [vmem:[#allocation4 + $0x1b0] sm:$0xff]
    %v95 = vld [vmem:[#allocation4 + $0x1b8] sm:$0xff]
    %v96 = vld [vmem:[#allocation4 + $0x1c8] sm:$0xff]
    %v97 = vld [vmem:[#allocation4 + $0x1d0] sm:$0xff]
    %v98 = vld [vmem:[#allocation4 + $0x1e0] sm:$0xff]
    %v99 = vld [vmem:[#allocation4 + $0x1e8] sm:$0xff]
    %v100 = vld [vmem:[#allocation4 + $0x1f8] sm:$0xff]
    %v101 = vld [vmem:[#allocation4 + $0x200] sm:$0xff]
    %v102 = vld [vmem:[#allocation4 + $0x210] sm:$0xff]
    %v103 = vld [vmem:[#allocation4 + $0x218] sm:$0xff]
    %v104 = vld [vmem:[#allocation4 + $0x228] sm:$0xff]
    %v105 = vld [vmem:[#allocation4 + $0x230] sm:$0xff]
    %v106 = vld [vmem:[#allocation4 + $0x240] sm:$0xff]
    %v107 = vld [vmem:[#allocation4 + $0x248] sm:$0xff]
    %v108 = vld [vmem:[#allocation4 + $0x258] sm:$0xff]
    %v109 = vld [vmem:[#allocation4 + $0x260] sm:$0xff]
    %v110 = vld [vmem:[#allocation4 + $0x270] sm:$0xff]
    %v111 = vld [vmem:[#allocation4 + $0x278] sm:$0xff]
    %v112 = vld [vmem:[#allocation4 + $0x288] sm:$0xff]
    %v113 = vld [vmem:[#allocation4 + $0x290] sm:$0xff]
    %v114 = vld [vmem:[#allocation4 + $0x2a0] sm:$0xff]
    %v115 = vld [vmem:[#allocation4 + $0x2a8] sm:$0xff]
    %v116 = vld [vmem:[#allocation4 + $0x2b8] sm:$0xff]
    %v117 = vld [vmem:[#allocation4 + $0x2c0] sm:$0xff]
    %v118 = vld [vmem:[#allocation4 + $0x2d0] sm:$0xff]
    %v119 = vld [vmem:[#allocation4 + $0x2d8] sm:$0xff]
    %v120 = vld [vmem:[#allocation4 + $0x2e8] sm:$0xff]
    %v121 = vld [vmem:[#allocation4 + $0x2f0] sm:$0xff]
    %v122 = vld [vmem:[#allocation4 + $0x300] sm:$0xff]
    %v123 = vld [vmem:[#allocation4 + $0x308] sm:$0xff]
    %v124 = vld [vmem:[#allocation4 + $0x318] sm:$0xff]
    %v125 = vld [vmem:[#allocation4 + $0x320] sm:$0xff]
    %v126 = vld [vmem:[#allocation4 + $0x330] sm:$0xff]
    %v127 = vld [vmem:[#allocation4 + $0x338] sm:$0xff]
    %v128 = vld [vmem:[#allocation4 + $0x348] sm:$0xff]
    %v129 = vld [vmem:[#allocation4 + $0x350] sm:$0xff]
    %v130 = vld [vmem:[#allocation4 + $0x360] sm:$0xff]
    %v131 = vld [vmem:[#allocation4 + $0x368] sm:$0xff]
    %v132 = vld [vmem:[#allocation4 + $0x378] sm:$0xff]
    %v133 = vld [vmem:[#allocation4 + $0x380] sm:$0xff]
    %v134 = vld [vmem:[#allocation4 + $0x390] sm:$0xff]
    %v135 = vld [vmem:[#allocation4 + $0x398] sm:$0xff]
    %v136 = vld [vmem:[#allocation4 + $0x3a8] sm:$0xff]
    %v137 = vld [vmem:[#allocation4 + $0x3b0] sm:$0xff]
    %v138 = vld [vmem:[#allocation4 + $0x3c0] sm:$0xff]
    %v139 = vld [vmem:[#allocation4 + $0x3c8] sm:$0xff]
    %v140 = vld [vmem:[#allocation4 + $0x3d0] sm:$0xff]
    %v141 = vld [vmem:[#allocation4 + $0x3d8] sm:$0xff]
    %v142 = vld [vmem:[#allocation4 + $0x3e0] sm:$0xff]
    %v143 = vld [vmem:[#allocation4 + $0x3e8] sm:$0xff]
    %v144 = vld [vmem:[#allocation4 + $0x3f0] sm:$0xff]
    %v145 = vld [vmem:[#allocation4 + $0x3f8] sm:$0xff]
    %v146 = vld [vmem:[#allocation4 + $0x400] sm:$0xff]
    %v147 = vld [vmem:[#allocation4 + $0x408] sm:$0xff]
    %v148 = vld [vmem:[#allocation4 + $0x410] sm:$0xff]
    %v149 = vld [vmem:[#allocation4 + $0x418] sm:$0xff]
    %v150 = vld [vmem:[#allocation4 + $0x420] sm:$0xff]
    %v151 = vld [vmem:[#allocation4 + $0x428] sm:$0xff]
    %v152 = vld [vmem:[#allocation4 + $0x430] sm:$0xff]
    %v153 = vld [vmem:[#allocation4 + $0x438] sm:$0xff]
    %v154 = vld [vmem:[#allocation4 + $0x440] sm:$0xff]
    %v155 = vld [vmem:[#allocation4 + $0x448] sm:$0xff]
    %v156 = vld [vmem:[#allocation4 + $0x450] sm:$0xff]
    %v157 = vld [vmem:[#allocation4 + $0x458] sm:$0xff]
    %v158 = vld [vmem:[#allocation4 + $0x460] sm:$0xff]
    %v159 = vld [vmem:[#allocation4 + $0x468] sm:$0xff]
    %v160 = vld [vmem:[#allocation4 + $0x470] sm:$0xff]
    %v161 = vld [vmem:[#allocation4 + $0x478] sm:$0xff]
    %v162 = vld [vmem:[#allocation4 + $0x480] sm:$0xff]
    %v163 = vld [vmem:[#allocation4 + $0x488] sm:$0xff]
    %v164 = vld [vmem:[#allocation4 + $0x490] sm:$0xff]
    %v165 = vld [vmem:[#allocation4 + $0x498] sm:$0xff]
    %v166 = vld [vmem:[#allocation4 + $0x4a0] sm:$0xff]
    %v167 = vld [vmem:[#allocation4 + $0x4a8] sm:$0xff]
    %v168 = vld [vmem:[#allocation4 + $0x4b0] sm:$0xff]
    %v169 = vld [vmem:[#allocation4 + $0x4b8] sm:$0xff]
    %v170 = vld [vmem:[#allocation4 + $0x4c0] sm:$0xff]
    %v171 = vld [vmem:[#allocation4 + $0x4c8] sm:$0xff]
    %v172 = vld [vmem:[#allocation4 + $0x4d0] sm:$0xff]
    %v173 = vld [vmem:[#allocation4 + $0x4d8] sm:$0xff]
    %v174 = vld [vmem:[#allocation4 + $0x4e0] sm:$0xff]
    %v175 = vld [vmem:[#allocation4 + $0x4e8] sm:$0xff]
    %v176 = vld [vmem:[#allocation4 + $0x4f0] sm:$0xff]
    %v177 = vld [vmem:[#allocation4 + $0x4f8] sm:$0xff]
    %v178 = vld [vmem:[#allocation4 + $0x500] sm:$0xff]
    %v179 = vld [vmem:[#allocation4 + $0x508] sm:$0xff]
    %v180 = vld [vmem:[#allocation4 + $0x510] sm:$0xff]
    %v181 = vld [vmem:[#allocation4 + $0x518] sm:$0xff]
    %v182 = vld [vmem:[#allocation4 + $0x520] sm:$0xff]
    %v183 = vld [vmem:[#allocation4 + $0x528] sm:$0xff]
    %v184 = vld [vmem:[#allocation4 + $0x530] sm:$0xff]
    %v185 = vld [vmem:[#allocation4 + $0x538] sm:$0xff]
    %v186 = vld [vmem:[#allocation4 + $0x540] sm:$0xff]
    %v187 = vld [vmem:[#allocation4 + $0x548] sm:$0xff]
    %v188 = vld [vmem:[#allocation4 + $0x550] sm:$0xff]
    %v189 = vld [vmem:[#allocation4 + $0x558] sm:$0xff]
    %v190 = vld [vmem:[#allocation4 + $0x560] sm:$0xff]
    %v191 = vld [vmem:[#allocation4 + $0x568] sm:$0xff]
    %v192 = vld [vmem:[#allocation4 + $0x570] sm:$0xff]
    %v193 = vld [vmem:[#allocation4 + $0x578] sm:$0xff]
    %v194 = vld [vmem:[#allocation4 + $0x580] sm:$0xff]
    %v195 = vld [vmem:[#allocation4 + $0x588] sm:$0xff]
    %v196 = vld [vmem:[#allocation4 + $0x590] sm:$0xff]
    %v197 = vld [vmem:[#allocation4 + $0x598] sm:$0xff]
    %v198 = vld [vmem:[#allocation4 + $0x5a0] sm:$0xff]
    %v199 = vld [vmem:[#allocation4 + $0x5a8] sm:$0xff]
    %v200 = vld [vmem:[#allocation4 + $0x5b0] sm:$0xff]
    %v201 = vld [vmem:[#allocation4 + $0x5b8] sm:$0xff]
    %v202 = vld [vmem:[#allocation4 + $0x5c0] sm:$0xff]
    %v203 = vld [vmem:[#allocation4 + $0x5c8] sm:$0xff]
    %v204 = vld [vmem:[#allocation4 + $0x5d0] sm:$0xff]
    %v205 = vld [vmem:[#allocation4 + $0x5d8] sm:$0xff]
    %v206 = vld [vmem:[#allocation4 + $0x5e0] sm:$0xff]
    %v207 = vld [vmem:[#allocation4 + $0x5e8] sm:$0xff]
    %v208 = vld [vmem:[#allocation4 + $0x5f0] sm:$0xff]
    %v209 = vld [vmem:[#allocation4 + $0x5f8] sm:$0xff]
    %v210 = vld [vmem:[#allocation4 + $0x600] sm:$0xff]
    %v211 = vld [vmem:[#allocation4 + $0x608] sm:$0xff]
    %v212 = vld [vmem:[#allocation4 + $0x610] sm:$0xff]
    %v213 = vld [vmem:[#allocation4 + $0x618] sm:$0xff]
    %v214 = vld [vmem:[#allocation4 + $0x620] sm:$0xff]
    %v215 = vld [vmem:[#allocation4 + $0x628] sm:$0xff]
    %v216 = vld [vmem:[#allocation4 + $0x630] sm:$0xff]
    %v217 = vld [vmem:[#allocation4 + $0x638] sm:$0xff]
    %v218 = vld [vmem:[#allocation4 + $0x640] sm:$0xff]
    %v219 = vld [vmem:[#allocation4 + $0x648] sm:$0xff]
    %v220 = vld [vmem:[#allocation4 + $0x650] sm:$0xff]
    %v221 = vld [vmem:[#allocation4 + $0x658] sm:$0xff]
    %v222 = vld [vmem:[#allocation4 + $0x660] sm:$0xff]
    %v223 = vld [vmem:[#allocation4 + $0x668] sm:$0xff]
    %v224 = vld [vmem:[#allocation4 + $0x670] sm:$0xff]
    %v225 = vld [vmem:[#allocation4 + $0x678] sm:$0xff]
    %v226 = vld [vmem:[#allocation4 + $0x680] sm:$0xff]
    %v227 = vld [vmem:[#allocation4 + $0x688] sm:$0xff]
    %v228 = vld [vmem:[#allocation4 + $0x690] sm:$0xff]
    %v229 = vld [vmem:[#allocation4 + $0x698] sm:$0xff]
    %v230 = vld [vmem:[#allocation4 + $0x6a0] sm:$0xff]
    %v231 = vld [vmem:[#allocation4 + $0x6a8] sm:$0xff]
    %v232 = vld [vmem:[#allocation4 + $0x6b0] sm:$0xff]
    %v233 = vld [vmem:[#allocation4 + $0x6b8] sm:$0xff]
    %v234 = vld [vmem:[#allocation6] ss:$8 sm:$0x7]
    %s235 = scalar_lea.vmem [#allocation6], 1
    %v236 = vld [vmem:[%s235] ss:$8 sm:$0x7]
    %s237 = scalar_lea.vmem [#allocation6], 2
    %v238 = vld [vmem:[%s237] ss:$8 sm:$0x7]
    %s239 = scalar_lea.vmem [#allocation6], 3
    %v240 = vld [vmem:[%s239] ss:$8 sm:$0x7]
    %v242 = vperm.slane %v234, 0
    %v243 = vperm.slane %v234, 1
    %vm246 = vcmask 523264
    %v248 = vsel %vm246, %v57, 0
    %250 = vmatpush.msra.mxu0 0.0
    %251 = vmatpush.msra.mxu0 0.0
    %252 = vmatpush.msra.mxu0 0.0
    %253 = vmatpush.msra.mxu0 0.0
    %254 = vmatpush.msra.mxu0 0.0
    %255 = vmatpush.msra.mxu0 0.0
    %256 = vmatpush.msra.mxu0 0.0
    %257 = vmatpush.msra.mxu0 0.0
    %258 = vmatpush.msra.mxu0 %v72
    %259 = vmatpush.msra.mxu0 %v70
    %260 = vmatpush.msra.mxu0 %v68
    %261 = vmatpush.msra.mxu0 %v66
    %262 = vmatpush.msra.mxu0 %v64
    %263 = vmatpush.msra.mxu0 %v62
    %264 = vmatpush.msra.mxu0 %v60
    %265 = vmatpush.msra.mxu0 %v58
    %266 = vmatmul.f32.gmra.mxu0 %v248
    %v267 = vpop.f32.mrf.mxu0
    %v268 = vadd.f32 %v242, %v267
    %269 = vdwg.mxu0
    %270 = vmatpush.msra.mxu0 0.0
    %271 = vmatpush.msra.mxu0 0.0
    %272 = vmatpush.msra.mxu0 0.0
    %273 = vmatpush.msra.mxu0 0.0
    %274 = vmatpush.msra.mxu0 0.0
    %275 = vmatpush.msra.mxu0 0.0
    %276 = vmatpush.msra.mxu0 0.0
    %277 = vmatpush.msra.mxu0 0.0
    %278 = vmatpush.msra.mxu0 %v73
    %279 = vmatpush.msra.mxu0 %v71
    %280 = vmatpush.msra.mxu0 %v69
    %281 = vmatpush.msra.mxu0 %v67
    %282 = vmatpush.msra.mxu0 %v65
    %283 = vmatpush.msra.mxu0 %v63
    %284 = vmatpush.msra.mxu0 %v61
    %285 = vmatpush.msra.mxu0 %v59
    %286 = vmatmul.f32.gmra.mxu0 %v248
    %v287 = vpop.f32.mrf.mxu0
    %v288 = vadd.f32 %v243, %v287
    %289 = vdwg.mxu0
    %v290 = vmax.f32 %v268, 0.0
    %v291 = vmax.f32 %v288, 0.0
    %v293 = vperm.slane %v236, 0
    %v294 = vperm.slane %v236, 1
    %297 = vmatpush.msra.mxu0 %v104
    %298 = vmatpush.msra.mxu0 %v102
    %299 = vmatpush.msra.mxu0 %v100
    %300 = vmatpush.msra.mxu0 %v98
    %301 = vmatpush.msra.mxu0 %v96
    %302 = vmatpush.msra.mxu0 %v94
    %303 = vmatpush.msra.mxu0 %v92
    %304 = vmatpush.msra.mxu0 %v90
    %305 = vmatpush.msra.mxu0 %v88
    %306 = vmatpush.msra.mxu0 %v86
    %307 = vmatpush.msra.mxu0 %v84
    %308 = vmatpush.msra.mxu0 %v82
    %309 = vmatpush.msra.mxu0 %v80
    %310 = vmatpush.msra.mxu0 %v78
    %311 = vmatpush.msra.mxu0 %v76
    %312 = vmatpush.msra.mxu0 %v74
    %313 = vmatmul.f32.gmra.mxu0 %v290
    %v314 = vpop.f32.mrf.mxu0
    %v315 = vadd.f32 %v293, %v314
    %316 = vdwg.mxu0
    %317 = vmatpush.msra.mxu0 %v136
    %318 = vmatpush.msra.mxu0 %v134
    %319 = vmatpush.msra.mxu0 %v132
    %320 = vmatpush.msra.mxu0 %v130
    %321 = vmatpush.msra.mxu0 %v128
    %322 = vmatpush.msra.mxu0 %v126
    %323 = vmatpush.msra.mxu0 %v124
    %324 = vmatpush.msra.mxu0 %v122
    %325 = vmatpush.msra.mxu0 %v120
    %326 = vmatpush.msra.mxu0 %v118
    %327 = vmatpush.msra.mxu0 %v116
    %328 = vmatpush.msra.mxu0 %v114
    %329 = vmatpush.msra.mxu0 %v112
    %330 = vmatpush.msra.mxu0 %v110
    %331 = vmatpush.msra.mxu0 %v108
    %332 = vmatpush.msra.mxu0 %v106
    %333 = vmatmul.f32.gmra.mxu0 %v291
    %v334 = vpop.f32.mrf.mxu0
    %v335 = vadd.f32 %v315, %v334
    %336 = vdwg.mxu0
    %337 = vmatpush.msra.mxu0 %v105
    %338 = vmatpush.msra.mxu0 %v103
    %339 = vmatpush.msra.mxu0 %v101
    %340 = vmatpush.msra.mxu0 %v99
    %341 = vmatpush.msra.mxu0 %v97
    %342 = vmatpush.msra.mxu0 %v95
    %343 = vmatpush.msra.mxu0 %v93
    %344 = vmatpush.msra.mxu0 %v91
    %345 = vmatpush.msra.mxu0 %v89
    %346 = vmatpush.msra.mxu0 %v87
    %347 = vmatpush.msra.mxu0 %v85
    %348 = vmatpush.msra.mxu0 %v83
    %349 = vmatpush.msra.mxu0 %v81
    %350 = vmatpush.msra.mxu0 %v79
    %351 = vmatpush.msra.mxu0 %v77
    %352 = vmatpush.msra.mxu0 %v75
    %353 = vmatmul.f32.gmra.mxu0 %v290
    %v354 = vpop.f32.mrf.mxu0
    %v355 = vadd.f32 %v294, %v354
    %356 = vdwg.mxu0
    %357 = vmatpush.msra.mxu0 %v137
    %358 = vmatpush.msra.mxu0 %v135
    %359 = vmatpush.msra.mxu0 %v133
    %360 = vmatpush.msra.mxu0 %v131
    %361 = vmatpush.msra.mxu0 %v129
    %362 = vmatpush.msra.mxu0 %v127
    %363 = vmatpush.msra.mxu0 %v125
    %364 = vmatpush.msra.mxu0 %v123
    %365 = vmatpush.msra.mxu0 %v121
    %366 = vmatpush.msra.mxu0 %v119
    %367 = vmatpush.msra.mxu0 %v117
    %368 = vmatpush.msra.mxu0 %v115
    %369 = vmatpush.msra.mxu0 %v113
    %370 = vmatpush.msra.mxu0 %v111
    %371 = vmatpush.msra.mxu0 %v109
    %372 = vmatpush.msra.mxu0 %v107
    %373 = vmatmul.f32.gmra.mxu0 %v291
    %v374 = vpop.f32.mrf.mxu0
    %v375 = vadd.f32 %v355, %v374
    %376 = vdwg.mxu0
    %v377 = vmax.f32 %v335, 0.0
    %v378 = vmax.f32 %v375, 0.0
    %v380 = vperm.slane %v238, 0
    %v381 = vperm.slane %v238, 1
    %v382 = vperm.slane %v238, 2
    %386 = vmatpush.msra.mxu0 %v183
    %387 = vmatpush.msra.mxu0 %v180
    %388 = vmatpush.msra.mxu0 %v177
    %389 = vmatpush.msra.mxu0 %v174
    %390 = vmatpush.msra.mxu0 %v171
    %391 = vmatpush.msra.mxu0 %v168
    %392 = vmatpush.msra.mxu0 %v165
    %393 = vmatpush.msra.mxu0 %v162
    %394 = vmatpush.msra.mxu0 %v159
    %395 = vmatpush.msra.mxu0 %v156
    %396 = vmatpush.msra.mxu0 %v153
    %397 = vmatpush.msra.mxu0 %v150
    %398 = vmatpush.msra.mxu0 %v147
    %399 = vmatpush.msra.mxu0 %v144
    %400 = vmatpush.msra.mxu0 %v141
    %401 = vmatpush.msra.mxu0 %v138
    %402 = vmatmul.f32.gmra.mxu0 %v377
    %v403 = vpop.f32.mrf.mxu0
    %v404 = vadd.f32 %v380, %v403
    %405 = vdwg.mxu0
    %406 = vmatpush.msra.mxu0 %v231
    %407 = vmatpush.msra.mxu0 %v228
    %408 = vmatpush.msra.mxu0 %v225
    %409 = vmatpush.msra.mxu0 %v222
    %410 = vmatpush.msra.mxu0 %v219
    %411 = vmatpush.msra.mxu0 %v216
    %412 = vmatpush.msra.mxu0 %v213
    %413 = vmatpush.msra.mxu0 %v210
    %414 = vmatpush.msra.mxu0 %v207
    %415 = vmatpush.msra.mxu0 %v204
    %416 = vmatpush.msra.mxu0 %v201
    %417 = vmatpush.msra.mxu0 %v198
    %418 = vmatpush.msra.mxu0 %v195
    %419 = vmatpush.msra.mxu0 %v192
    %420 = vmatpush.msra.mxu0 %v189
    %421 = vmatpush.msra.mxu0 %v186
    %422 = vmatmul.f32.gmra.mxu0 %v378
    %v423 = vpop.f32.mrf.mxu0
    %v424 = vadd.f32 %v404, %v423
    %425 = vdwg.mxu0
    %426 = vmatpush.msra.mxu0 %v184
    %427 = vmatpush.msra.mxu0 %v181
    %428 = vmatpush.msra.mxu0 %v178
    %429 = vmatpush.msra.mxu0 %v175
    %430 = vmatpush.msra.mxu0 %v172
    %431 = vmatpush.msra.mxu0 %v169
    %432 = vmatpush.msra.mxu0 %v166
    %433 = vmatpush.msra.mxu0 %v163
    %434 = vmatpush.msra.mxu0 %v160
    %435 = vmatpush.msra.mxu0 %v157
    %436 = vmatpush.msra.mxu0 %v154
    %437 = vmatpush.msra.mxu0 %v151
    %438 = vmatpush.msra.mxu0 %v148
    %439 = vmatpush.msra.mxu0 %v145
    %440 = vmatpush.msra.mxu0 %v142
    %441 = vmatpush.msra.mxu0 %v139
    %442 = vmatmul.f32.gmra.mxu0 %v377
    %v443 = vpop.f32.mrf.mxu0
    %v444 = vadd.f32 %v381, %v443
    %445 = vdwg.mxu0
    %446 = vmatpush.msra.mxu0 %v232
    %447 = vmatpush.msra.mxu0 %v229
    %448 = vmatpush.msra.mxu0 %v226
    %449 = vmatpush.msra.mxu0 %v223
    %450 = vmatpush.msra.mxu0 %v220
    %451 = vmatpush.msra.mxu0 %v217
    %452 = vmatpush.msra.mxu0 %v214
    %453 = vmatpush.msra.mxu0 %v211
    %454 = vmatpush.msra.mxu0 %v208
    %455 = vmatpush.msra.mxu0 %v205
    %456 = vmatpush.msra.mxu0 %v202
    %457 = vmatpush.msra.mxu0 %v199
    %458 = vmatpush.msra.mxu0 %v196
    %459 = vmatpush.msra.mxu0 %v193
    %460 = vmatpush.msra.mxu0 %v190
    %461 = vmatpush.msra.mxu0 %v187
    %462 = vmatmul.f32.gmra.mxu0 %v378
    %v463 = vpop.f32.mrf.mxu0
    %v464 = vadd.f32 %v444, %v463
    %465 = vdwg.mxu0
    %466 = vmatpush.msra.mxu0 %v185
    %467 = vmatpush.msra.mxu0 %v182
    %468 = vmatpush.msra.mxu0 %v179
    %469 = vmatpush.msra.mxu0 %v176
    %470 = vmatpush.msra.mxu0 %v173
    %471 = vmatpush.msra.mxu0 %v170
    %472 = vmatpush.msra.mxu0 %v167
    %473 = vmatpush.msra.mxu0 %v164
    %474 = vmatpush.msra.mxu0 %v161
    %475 = vmatpush.msra.mxu0 %v158
    %476 = vmatpush.msra.mxu0 %v155
    %477 = vmatpush.msra.mxu0 %v152
    %478 = vmatpush.msra.mxu0 %v149
    %479 = vmatpush.msra.mxu0 %v146
    %480 = vmatpush.msra.mxu0 %v143
    %481 = vmatpush.msra.mxu0 %v140
    %482 = vmatmul.f32.gmra.mxu0 %v377
    %v483 = vpop.f32.mrf.mxu0
    %v484 = vadd.f32 %v382, %v483
    %485 = vdwg.mxu0
    %486 = vmatpush.msra.mxu0 %v233
    %487 = vmatpush.msra.mxu0 %v230
    %488 = vmatpush.msra.mxu0 %v227
    %489 = vmatpush.msra.mxu0 %v224
    %490 = vmatpush.msra.mxu0 %v221
    %491 = vmatpush.msra.mxu0 %v218
    %492 = vmatpush.msra.mxu0 %v215
    %493 = vmatpush.msra.mxu0 %v212
    %494 = vmatpush.msra.mxu0 %v209
    %495 = vmatpush.msra.mxu0 %v206
    %496 = vmatpush.msra.mxu0 %v203
    %497 = vmatpush.msra.mxu0 %v200
    %498 = vmatpush.msra.mxu0 %v197
    %499 = vmatpush.msra.mxu0 %v194
    %500 = vmatpush.msra.mxu0 %v191
    %501 = vmatpush.msra.mxu0 %v188
    %502 = vmatmul.f32.gmra.mxu0 %v378
    %v503 = vpop.f32.mrf.mxu0
    %v504 = vadd.f32 %v484, %v503
    %505 = vdwg.mxu0
    %v506 = vlaneseq
    %v507 = vand.u32 %v506, 127
    %v508 = vadd.s32 %v507, 128
    %v509 = vadd.s32 %v507, 256
    %vm510 = vcmp.lt.s32.totalorder %v507, 0
    %v511 = vsub.s32 0, %v507
    %v512 = vsel %vm510, %v511, %v507
    %v513 = vshrl.u32 %v512, 7
    %v514 = vand.u32 %v512, 127
    %v515 = vsub.s32 0, %v514
    %v516 = vsel %vm510, %v515, %v514
    %vm517 = vcmp.lt.s32.totalorder %v508, 0
    %v518 = vsub.s32 0, %v508
    %v519 = vsel %vm517, %v518, %v508
    %v520 = vshrl.u32 %v519, 7
    %v521 = vand.u32 %v519, 127
    %v522 = vsub.s32 0, %v521
    %v523 = vsel %vm517, %v522, %v521
    %vm524 = vcmp.lt.s32.totalorder %v509, 0
    %v525 = vsub.s32 0, %v509
    %v526 = vsel %vm524, %v525, %v509
    %v527 = vshrl.u32 %v526, 7
    %v528 = vand.u32 %v526, 127
    %v529 = vsub.s32 0, %v528
    %v530 = vsel %vm524, %v529, %v528
    %vm531 = vcmp.ne.s32.totalorder %v516, 0
    %vm532 = vcmp.ne.s32.totalorder %v523, 0
    %vm533 = vcmp.ne.s32.totalorder %v530, 0
    %vm534 = vcmp.lt.s32.totalorder %v516, 0
    %vm535 = vcmp.lt.s32.totalorder %v523, 0
    %vm536 = vcmp.lt.s32.totalorder %v530, 0
    %vm537 = vmand %vm534, %vm531
    %vm538 = vmand %vm535, %vm532
    %vm539 = vmand %vm536, %vm533
    %v540 = vadd.s32 %v516, 128
    %v541 = vadd.s32 %v523, 128
    %v542 = vadd.s32 %v530, 128
    %v543 = vsel %vm537, %v540, %v516
    %v544 = vsel %vm538, %v541, %v523
    %v545 = vsel %vm539, %v542, %v530
    %vm546 = vcmp.ge.s32.totalorder %v543, 5
    %vm547 = vcmp.ge.s32.totalorder %v544, 5
    %vm548 = vcmp.ge.s32.totalorder %v545, 5
    %v549 = vmax.f32 %v424, 0.0
    %v550 = vmax.f32 %v464, 0.0
    %v551 = vmax.f32 %v504, 0.0
    %v552 = vsel %vm546, 1, 0
    %v553 = vsel %vm547, 1, 0
    %v554 = vsel %vm548, 1, 0
    %vm555 = vcmp.eq.s32.totalorder %v552, 1
    %vm556 = vcmp.eq.s32.totalorder %v553, 1
    %vm557 = vcmp.eq.s32.totalorder %v554, 1
    %v558 = vsel %vm555, %v549, %v424
    %v559 = vsel %vm556, %v550, %v464
    %v560 = vsel %vm557, %v551, %v504
    %v562 = vperm.slane %v240, 0
    %v563 = vperm.slane %v240, 1
    %v564 = vperm.slane %v240, 2
    %v568 = vmul.f32 %v558, %v562
    %v569 = vmul.f32 %v559, %v563
    %v570 = vmul.f32 %v560, %v564
    %571 = vadd.xlane.f32.xlu0 %v568
    %v572 = vpop.xlane.xlu0 %571
    %v573 = vmul.f32 %v558, %v572
    %574 = vadd.xlane.f32.xlu0 %v569
    %v575 = vpop.xlane.xlu0 %574
    %v576 = vmul.f32 %v559, %v575
    %v577 = vadd.f32 %v573, %v576
    %578 = vadd.xlane.f32.xlu0 %v570
    %v579 = vpop.xlane.xlu0 %578
    %v580 = vmul.f32 %v560, %v579
    %v581 = vadd.f32 %v577, %v580
    %582 = vst [vmem:[%s3] sm:$0xff] %v581
    // Predicated region
    $region26: #{forward.1} parent=1 // pred_check
      _
    $region27: #{forward.1} parent=1 // pred_check_branch
      %584 = sbr.rel (0) target = $region29
    $region28: #{forward.1} parent=1 // pred_region
      _
    $region29: #{forward.1} parent=1 // pred_fallthru
      _
    // Predicated region
    $region30: #{forward.1} parent=1 // pred_check
      _
    $region31: #{forward.1} parent=1 // pred_check_branch
      %586 = sbr.rel (0) target = $region33
    $region32: #{forward.1} parent=1 // pred_region
      _
    $region33: #{forward.1} parent=1 // pred_fallthru
      _
    %587 = vsyncpa [#allocation3], 1
    %588 = vsyncpa [#allocation5], 1

</llo_original>
